<compile_context>
chip_gen: v7x
topology: tpu7x:2x2x1
jax: 0.10.0
libtpu: 0.0.40
codegen_flags: <defaults>
</compile_context>

<pallas_src>
import jax
import jax.numpy as jnp
from jax import lax
from jax.experimental import pallas as pl
from jax.experimental.pallas import tpu as pltpu

_EPS = 1.0 / 65535.0
_LANE = 128
_SUB = 8
_VREG_ELEMS = _SUB * _LANE          # 1024 elements = one f32 vreg

# Rows processed per in-kernel loop iteration (bounds unrolled code size).
_INNER_ROWS = 1024

# VMEM budget for the double-buffered *input* tiles (both buffers included).
# 16 MiB -> 8192x128 f32 blocks (2 operands) / >=5120 rows with an int8 mask.
_INPUT_TILE_BUDGET_BYTES = 16 * 1024 * 1024
# Raise the scoped-VMEM limit so the tiling is legal on v5e (16 MiB scoped
# default, 128 MiB physical) as well as v6e (128 MiB) / v7x (64 MiB).
_VMEM_LIMIT_BYTES = 32 * 1024 * 1024


def _round_down(x, m):
    return (x // m) * m


def _round_up(x, m):
    return ((x + m - 1) // m) * m


def _make_mrae_kernel(block_rows, inner_rows, inner_blocks, valid_rows,
                      needs_tail_mask, has_mask):
    """Builds a sum-of-relative-diffs kernel with static config baked in."""
    n_inner = block_rows // inner_rows
    rem_rows = block_rows - n_inner * inner_rows      # < inner_rows

    def kernel(*refs):
        if has_mask:
            o_ref, t_ref, m_ref, sum_ref = refs
        else:
            (o_ref, t_ref, sum_ref), m_ref = refs, None

        p = pl.program_id(0)        # "parallel" axis (TensorCore split)
        j = pl.program_id(1)        # "arbitrary" reduction axis

        @pl.when(j == 0)
        def _():
            # Output block is resident across the reduction axis: accumulator.
            sum_ref[...] = jnp.zeros_like(sum_ref)

        # Logical (unclamped) global row of this block's first row; only used
        # for the validity mask.  The DMA uses a clamped block index (see the
        # input index_map), so over-scanned blocks never read out of bounds.
        block_row0 = (p * inner_blocks + j) * block_rows

        def accum_chunk(row_start, nrows):
            full = (isinstance(row_start, int) and row_start == 0
                    and nrows == block_rows)
            if full:
                o = o_ref[...]
                t = t_ref[...]
            else:
                if not isinstance(row_start, int):
                    row_start = pl.multiple_of(row_start, inner_rows)
                sl = pl.ds(row_start, nrows)
                o = o_ref[sl, :]
                t = t_ref[sl, :]
            o = o.astype(jnp.float32)
            t = t.astype(jnp.float32)

            if needs_tail_mask:
                ridx = (block_row0 + row_start
                        + lax.broadcasted_iota(jnp.int32, (nrows, _LANE), 0))
                valid = ridx < valid_rows
                # Mask the target BEFORE the divide so garbage rows (partial
                # edge block / over-scanned block) cannot produce inf/NaN.
                t = jnp.where(valid, t, 1.0)

            # Exact divide (not approx reciprocal) for parity with PyTorch.
            rd = jnp.abs(o - t) / (t + _EPS)

            if has_mask:
                mv = m_ref[...] if full else m_ref[sl, :]
                rd = mv.astype(jnp.float32) * rd

            if needs_tail_mask:
                rd = jnp.where(valid, rd, 0.0)

            # VPU-only partial reduce: fold rows 8-wise into the resident
            # (8,128) accumulator (no per-step cross-lane XLU reduce).
            sum_ref[...] += rd.reshape(nrows // _SUB, _SUB, _LANE).sum(axis=0)

        if n_inner == 1:
            accum_chunk(0, inner_rows)
        else:
            @pl.loop(0, n_inner)
            def _(i):
                accum_chunk(i * inner_rows, inner_rows)
        if rem_rows:
            accum_chunk(n_inner * inner_rows, rem_rows)

    return kernel


def mrae(output, target, mask=None, *, max_block_rows=None):
    """mean(|output - target| / (target + 1/65535)), optionally scaled by mask."""
    assert output.shape == target.shape

    n = 1
    for d in output.shape:
        n *= int(d)

    has_mask = mask is not None
    m = None
    if has_mask:
        assert mask.shape == output.shape
        m = mask
        if m.dtype == jnp.bool_:
            # TODO(synk): a zero-copy PRED->int8 reinterpret (bitcast) is not
            # portably supported; keep the 1-byte convert (one extra small pass).
            m = m.astype(jnp.int8)

    # Split into a lane-dense (rows, 128) main slab (kernel) and a < 1024
    # element tail (plain JAX).  Avoids jnp.pad full-tensor copies entirely.
    n_main = _round_down(n, _VREG_ELEMS)
    n_tail = n - n_main
    rows = n_main // _LANE

    tail_sum = jnp.float32(0.0)
    if n_tail:
        o_t = output.reshape(-1)[n_main:].astype(jnp.float32)
        t_t = target.reshape(-1)[n_main:].astype(jnp.float32)
        rd_t = jnp.abs(o_t - t_t) / (t_t + _EPS)
        if has_mask:
            rd_t = m.reshape(-1)[n_main:].astype(jnp.float32) * rd_t
        tail_sum = jnp.sum(rd_t, dtype=jnp.float32)

    if rows == 0:
        return (tail_sum / jnp.float32(n)).astype(jnp.float32)

    def as_rows(x):
        flat = x.reshape(-1)                      # metadata-only reshape
        if n_tail:
            flat = flat[:n_main]                  # prefix slice, no full copy
        return flat.reshape(rows, _LANE)

    operands = [as_rows(output), as_rows(target)]
    if has_mask:
        operands.append(as_rows(m))

    # ---- block-size selection: fill the double-buffered input VMEM budget ----
    itemsizes = [jnp.dtype(op.dtype).itemsize for op in operands]
    per_row_bytes = 2 * _LANE * sum(itemsizes)    # x2 = double buffering
    blk = _INPUT_TILE_BUDGET_BYTES // per_row_bytes
    if blk >= _INNER_ROWS:
        blk = _round_down(blk, _INNER_ROWS)
    else:
        blk = max(_SUB, _round_down(blk, _SUB))
    if max_block_rows is not None:
        blk = max(_SUB, min(blk, int(max_block_rows)))

    # Sublane-packing granularity of the narrowest operand dtype
    # (f32: 8, bf16: 16, int8/bool-mask: 32 rows per vreg).
    gran = (4 // min(itemsizes)) * _SUB

    block_rows = min(blk, rows)
    if block_rows < rows:
        block_rows = _round_down(block_rows, gran)
        if block_rows == 0:
            block_rows = min(gran, rows)
    assert block_rows % _SUB == 0

    num_blocks = pl.cdiv(rows, block_rows)
    if num_blocks >= 3 and num_blocks % 2 == 1:
        # Odd block count: try a slightly smaller block so the sweep splits
        # evenly across two TensorCores with no over-scanned (wasted) block.
        cand = max(_SUB, _round_up(pl.cdiv(rows, num_blocks + 1), gran))
        if cand < rows and pl.cdiv(rows, cand) % 2 == 0:
            block_rows = cand
            num_blocks = pl.cdiv(rows, block_rows)

    # Always split across two TensorCores when there is >1 block (v7x / v5p).
    # If num_blocks is still odd, one block is over-scanned: its DMA block
    # index is clamped (no OOB read) and its contribution is masked to zero.
    num_par = 2 if num_blocks >= 2 else 1
    inner_blocks = pl.cdiv(num_blocks, num_par)
    scanned_rows = num_par * inner_blocks * block_rows
    needs_tail_mask = scanned_rows != rows
    last_block = num_blocks - 1

    inner_rows = min(block_rows, _INNER_ROWS)

    in_tile = pl.BlockSpec(
        (block_rows, _LANE),
        lambda p, j: (jnp.minimum(p * inner_blocks + j, last_block), 0))
    # One (8,128) partial-sum slab per parallel chunk; summed in JAX glue.
    out_spec = pl.BlockSpec((_SUB, _LANE), lambda p, j: (p, 0))

    kernel = _make_mrae_kernel(block_rows, inner_rows, inner_blocks, rows,
                               needs_tail_mask, has_mask)

    partials = pl.pallas_call(
        kernel,
        out_shape=jax.ShapeDtypeStruct((num_par * _SUB, _LANE), jnp.float32),
        grid_spec=pltpu.PrefetchScalarGridSpec(
            num_scalar_prefetch=0,
            grid=(num_par, inner_blocks),
            in_specs=[in_tile] * len(operands),
            out_specs=out_spec,
        ),
        compiler_params=pltpu.CompilerParams(
            dimension_semantics=("parallel", "arbitrary"),
            vmem_limit_bytes=_VMEM_LIMIT_BYTES),
    )(*operands)

    total = jnp.sum(partials, dtype=jnp.float32) + tail_sum
    return (total / jnp.float32(n)).astype(jnp.float32)


def _mrae_ref(output, target, mask=None):
    o = output.astype(jnp.float32)
    t = target.astype(jnp.float32)
    rd = jnp.abs(o - t) / (t + _EPS)
    if mask is not None:
        rd = mask.astype(jnp.float32) * rd
    return jnp.mean(rd)


if __name__ == "__main__":
    key = jax.random.PRNGKey(0)
    k1, k2, k3, k4, k5 = jax.random.split(key, 5)

    def check(name, res, ref):
        res = jax.block_until_ready(res)
        assert jnp.allclose(res, ref, rtol=1e-5, atol=1e-6), (name, res, ref)

    # 1) f32 NCHW, no mask, single block.
    shape = (2, 4, 16, 16)
    out32 = jax.random.uniform(k1, shape, dtype=jnp.float32)
    tgt32 = jax.random.uniform(k2, shape, dtype=jnp.float32) + 0.1
    check("f32", mrae(out32, tgt32), _mrae_ref(out32, tgt32))

    # 2) float mask (typical PyTorch usage).
    mask32 = (jax.random.uniform(k3, shape) > 0.5).astype(jnp.float32)
    check("f32+mask", mrae(out32, tgt32, mask32), _mrae_ref(out32, tgt32, mask32))

    # 3) bool mask (converted to int8, multiply in-kernel).
    maskb = jax.random.uniform(k3, shape) > 0.5
    check("f32+bool_mask", mrae(out32, tgt32, maskb), _mrae_ref(out32, tgt32, maskb))

    # 4) bf16 inputs stay bf16 in HBM; the f32 cast happens inside the kernel.
    check("bf16",
          mrae(out32.astype(jnp.bfloat16), tgt32.astype(jnp.bfloat16)),
          _mrae_ref(out32.astype(jnp.bfloat16), tgt32.astype(jnp.bfloat16)))

    # 5) Odd block count where the even-split shrink is impossible ->
    #    over-scanned (clamped + masked) block on the second parallel chunk.
    shape_t = (2, 4, 16, 24)            # n = 3072 -> rows = 24
    out_t = jax.random.uniform(k4, shape_t, dtype=jnp.float32)
    tgt_t = jax.random.uniform(k5, shape_t, dtype=jnp.float32) + 0.1
    mask_t = (out_t > 0.3).astype(jnp.float32)
    check("overscan", mrae(out_t, tgt_t, mask_t, max_block_rows=8),
          _mrae_ref(out_t, tgt_t, mask_t))

    # 6) Odd block count that IS shrunk to an even split + partial edge block.
    shape_s = (2, 4, 32, 40)            # n = 10240 -> rows = 80
    out_s = jax.random.uniform(k1, shape_s, dtype=jnp.float32)
    tgt_s = jax.random.uniform(k2, shape_s, dtype=jnp.float32) + 0.1
    mask_s = (out_s > 0.4).astype(jnp.float32)
    check("even_shrink", mrae(out_s, tgt_s, mask_s, max_block_rows=32),
          _mrae_ref(out_s, tgt_s, mask_s))

    # 7) Multi-block grid with a bool (int8) mask -> 32-row packing granularity.
    shape_m = (2, 4, 32, 32)            # n = 8192 -> rows = 64
    out_m = jax.random.uniform(k3, shape_m, dtype=jnp.float32)
    tgt_m = jax.random.uniform(k4, shape_m, dtype=jnp.float32) + 0.1
    mask_m = out_m > 0.5
    check("bool_multiblock", mrae(out_m, tgt_m, mask_m, max_block_rows=16),
          _mrae_ref(out_m, tgt_m, mask_m))

    # 8) Big single block -> in-kernel pl.loop over 1024-row chunks + remainder.
    shape_l = (8, 8, 72, 64)            # n = 294912 -> rows = 2304
    out_l = jax.random.uniform(k4, shape_l, dtype=jnp.float32)
    tgt_l = jax.random.uniform(k5, shape_l, dtype=jnp.float32) + 0.1
    mask_l = (out_l > 0.5).astype(jnp.float32)
    check("inner_loop", mrae(out_l, tgt_l, mask_l),
          _mrae_ref(out_l, tgt_l, mask_l))

    # 9) numel not a multiple of 1024 -> kernel on the main slab + JAX tail.
    shape_o = (3, 5, 7, 11)             # n = 1155
    out_o = jax.random.uniform(k1, shape_o, dtype=jnp.float32)
    tgt_o = jax.random.uniform(k2, shape_o, dtype=jnp.float32) + 0.1
    mask_o = out_o > 0.2
    check("tail", mrae(out_o, tgt_o, mask_o), _mrae_ref(out_o, tgt_o, mask_o))

    # 10) numel < 1024 -> pure JAX tail path (no pallas_call).
    shape_p = (2, 4, 8, 4)              # n = 256
    out_p = jax.random.uniform(k3, shape_p, dtype=jnp.float32)
    tgt_p = jax.random.uniform(k4, shape_p, dtype=jnp.float32) + 0.1
    check("tiny", mrae(out_p, tgt_p), _mrae_ref(out_p, tgt_p))

    print("KERNEL_OK")
</pallas_src>

<mosaic_0001>
module attributes {stable_mosaic.version = 11 : i64} {
  func.func @kernel(%arg0: i32, %arg1: i32, %arg2: memref<16x128xf32, #tpu.memory_space<vmem>>, %arg3: memref<16x128xf32, #tpu.memory_space<vmem>>, %arg4: memref<8x128xf32, #tpu.memory_space<vmem>>) attributes {dimension_semantics = [#tpu.dimension_semantics<parallel>, #tpu.dimension_semantics<arbitrary>], iteration_bounds = array<i64: 1, 1>, scalar_prefetch = 0 : i64, scratch_operands = 0 : i64, tpu.core_type = #tpu.core_type<tc>, window_params = [{transform_indices = @transform_0, window_bounds = array<i64: 16, 128>}, {transform_indices = @transform_1, window_bounds = array<i64: 16, 128>}, {transform_indices = @transform_2, window_bounds = array<i64: 8, 128>}]} {
    %c0_i32 = arith.constant 0 : i32
    %0 = arith.cmpi eq, %arg1, %c0_i32 : i32
    %1 = arith.extui %0 : i1 to i32
    %c0_i32_0 = arith.constant 0 : i32
    %2 = arith.cmpi ne, %1, %c0_i32_0 : i32
    scf.if %2 {
      %cst_9 = arith.constant 0.000000e+00 : f32
      %15 = vector.broadcast %cst_9 : f32 to vector<8x128xf32>
      %c0_10 = arith.constant 0 : index
      %c0_11 = arith.constant 0 : index
      %16 = vector.load %arg4[%c0_10, %c0_11] : memref<8x128xf32, #tpu.memory_space<vmem>>, vector<8x128xf32>
      tpu.vector_store %arg4[%c0_10, %c0_11], %15 {strides = array<i32>} : memref<8x128xf32, #tpu.memory_space<vmem>>, vector<8x128xf32>,
    } else {
    }
    %c0 = arith.constant 0 : index
    %c0_1 = arith.constant 0 : index
    %3 = vector.load %arg2[%c0, %c0_1] : memref<16x128xf32, #tpu.memory_space<vmem>>, vector<16x128xf32>
    %c0_2 = arith.constant 0 : index
    %c0_3 = arith.constant 0 : index
    %4 = vector.load %arg3[%c0_2, %c0_3] : memref<16x128xf32, #tpu.memory_space<vmem>>, vector<16x128xf32>
    %5 = arith.subf %3, %4 : vector<16x128xf32>
    %6 = math.absf %5 : vector<16x128xf32>
    %cst = arith.constant 1.52590219E-5 : f32
    %7 = vector.broadcast %cst : f32 to vector<16x128xf32>
    %8 = arith.addf %4, %7 : vector<16x128xf32>
    %9 = arith.divf %6, %8 : vector<16x128xf32>
    %c0_4 = arith.constant 0 : index
    %c0_5 = arith.constant 0 : index
    %10 = vector.load %arg4[%c0_4, %c0_5] : memref<8x128xf32, #tpu.memory_space<vmem>>, vector<8x128xf32>
    %11 = vector.shape_cast %9 : vector<16x128xf32> to vector<2x8x128xf32>
    %cst_6 = arith.constant dense<0.000000e+00> : vector<8x128xf32>
    %12 = vector.multi_reduction <add>, %11, %cst_6 [0] : vector<2x8x128xf32> to vector<8x128xf32>
    %13 = arith.addf %10, %12 : vector<8x128xf32>
    %c0_7 = arith.constant 0 : index
    %c0_8 = arith.constant 0 : index
    %14 = vector.load %arg4[%c0_7, %c0_8] : memref<8x128xf32, #tpu.memory_space<vmem>>, vector<8x128xf32>
    tpu.vector_store %arg4[%c0_7, %c0_8], %13 {strides = array<i32>} : memref<8x128xf32, #tpu.memory_space<vmem>>, vector<8x128xf32>,
    return
  }
  func.func @transform_0(%arg0: i32, %arg1: i32) -> (i32, i32) {
    %c1_i32 = arith.constant 1 : i32
    %0 = arith.muli %arg0, %c1_i32 : i32
    %1 = arith.addi %0, %arg1 : i32
    %c0_i32 = arith.constant 0 : i32
    %2 = arith.minsi %1, %c0_i32 : i32
    %c0_i32_0 = arith.constant 0 : i32
    %c0_i32_1 = arith.constant 0 : i32
    return %2, %c0_i32_0 : i32, i32
  }
  func.func @transform_1(%arg0: i32, %arg1: i32) -> (i32, i32) {
    %c1_i32 = arith.constant 1 : i32
    %0 = arith.muli %arg0, %c1_i32 : i32
    %1 = arith.addi %0, %arg1 : i32
    %c0_i32 = arith.constant 0 : i32
    %2 = arith.minsi %1, %c0_i32 : i32
    %c0_i32_0 = arith.constant 0 : i32
    %c0_i32_1 = arith.constant 0 : i32
    return %2, %c0_i32_0 : i32, i32
  }
  func.func @transform_2(%arg0: i32, %arg1: i32) -> (i32, i32) {
    %c0_i32 = arith.constant 0 : i32
    %c0_i32_0 = arith.constant 0 : i32
    return %arg0, %c0_i32 : i32, i32
  }
}

</mosaic_0001>

<llo_original>
// kernel: tpu_custom_call.1
$region0: #{tpu_custom_call.1}
  #allocation0 [shape = 'u32[]', space=smem, size = 0x4, offset = 0x4, fixed_abs, tag = 'smem constant byte address 0x4 - core index']
  #allocation1 [shape = 'u32[144,128]{1,0:T(1,128)}', space=vmem, size = 0x12000, scoped, tag = 'internal scratch']
  %s0 = inlined_call_operand.hbm [shape: f32[16,128], index: 0, kind: input, shape index: {}]
  %s1 = inlined_call_operand.hbm [shape: f32[16,128], index: 1, kind: input, shape index: {}]
  %s2 = inlined_call_operand.hbm [shape: f32[8,128], index: 2, kind: output, shape index: {}]
  %s3 = sld [smem:[#allocation0]]
  $region30: #{tpu_custom_call.1} parent=0
    _
  %s5 = ssub.s32 1, %s3
  %s6 = scalar_select 0, %s5, %s3
  $region1: #{tpu_custom_call.1} parent=0
    #allocation2 [shape = 'u8[8192]{0}', space=vmem, size = 0x2000, scoped, tag = 'input window, operand 0, single buffered']
    #allocation3 [shape = 's32[1]{0}', space=sflag, size = 0x4, scoped, tag = 'scoped memory for tpu_custom_call.1']
    #allocation4 [shape = 's32[1]{0}', space=sflag, size = 0x4, scoped, tag = 'scoped memory for tpu_custom_call.1']
    #allocation5 [shape = 'u8[8192]{0}', space=vmem, size = 0x2000, scoped, tag = 'input window, operand 1, single buffered']
    #allocation6 [shape = 's32[1]{0}', space=sflag, size = 0x4, scoped, tag = 'scoped memory for tpu_custom_call.1']
    #allocation7 [shape = 'u8[4096]{0}', space=vmem, size = 0x1000, scoped, tag = 'output window, operand 0, single buffered']
    %7 = vsyncpa [#allocation3], 0
    %8 = vsyncpa [#allocation6], 0
    %9 = vsyncpa [#allocation4], 0
    // Predicated region
    $region2: #{tpu_custom_call.1} parent=1 // pred_check
      _
    $region3: #{tpu_custom_call.1} parent=1 // pred_check_branch
      %11 = sbr.rel (0) target = $region5
    $region4: #{tpu_custom_call.1} parent=1 // pred_region
      %s12 = sadd.s32 0, 0
      %p13 = scmp.lt.s32.totalorder %s12, 0
      %s14 = scalar_select %p13, %s12, 0
      %s15 = smul.u32 2, %s14
      %s17 = ssub.s32 256, 256
      %18 = vsyncadd [#allocation3], %s17
      %s19 = smul.addr %s15, 128
      %s20 = scalar_lea.hbm %s0, %s19
      %s21 = sshll.u32 [#allocation2], 4
      %s22 = int_to_ptr.vmem [resolvable:$true] %s21
      %27 = dma.hbm_to_vmem [thread:$0]  %s20, 256, %s22, [#allocation3], 128, 128, 8
    $region5: #{tpu_custom_call.1} parent=1 // pred_fallthru
      _
    // Predicated region
    $region6: #{tpu_custom_call.1} parent=1 // pred_check
      _
    $region7: #{tpu_custom_call.1} parent=1 // pred_check_branch
      %29 = sbr.rel (0) target = $region9
    $region8: #{tpu_custom_call.1} parent=1 // pred_region
      %s30 = sadd.s32 0, 0
      %p31 = scmp.lt.s32.totalorder %s30, 0
      %s32 = scalar_select %p31, %s30, 0
      %s33 = smul.u32 2, %s32
      %s35 = ssub.s32 256, 256
      %36 = vsyncadd [#allocation6], %s35
      %s37 = smul.addr %s33, 128
      %s38 = scalar_lea.hbm %s1, %s37
      %s39 = sshll.u32 [#allocation5], 4
      %s40 = int_to_ptr.vmem [resolvable:$true] %s39
      %45 = dma.hbm_to_vmem [thread:$0]  %s38, 256, %s40, [#allocation6], 128, 128, 8
    $region9: #{tpu_custom_call.1} parent=1 // pred_fallthru
      _
    // Predicated region
    $region10: #{tpu_custom_call.1} parent=1 // pred_check
      _
    $region11: #{tpu_custom_call.1} parent=1 // pred_check_branch
      %47 = sbr.rel (0) target = $region13
    $region12: #{tpu_custom_call.1} parent=1 // pred_region
      %48 = dma.done [#allocation3], 256
    $region13: #{tpu_custom_call.1} parent=1 // pred_fallthru
      _
    // Predicated region
    $region14: #{tpu_custom_call.1} parent=1 // pred_check
      _
    $region15: #{tpu_custom_call.1} parent=1 // pred_check_branch
      %50 = sbr.rel (0) target = $region17
    $region16: #{tpu_custom_call.1} parent=1 // pred_region
      %51 = dma.done [#allocation6], 256
    $region17: #{tpu_custom_call.1} parent=1 // pred_fallthru
      _
    %s52 = sadd.s32 0, 0
    %p53 = scmp.lt.s32.totalorder %s52, 0
    %s54 = scalar_select %p53, %s52, 0
    %s55 = smul.u32 2, %s54
    %s56 = sadd.s32 0, 0
    %p57 = scmp.lt.s32.totalorder %s56, 0
    %s58 = scalar_select %p57, %s56, 0
    %s59 = smul.u32 2, %s58
    %p60 = scmp.eq.s32.totalorder 0, 0
    // Predicated region
    $region18: #{tpu_custom_call.1} parent=1 // pred_check
      %p61 = pneg %p60
    $region19: #{tpu_custom_call.1} parent=1 // pred_check_branch
      %63 = sbr.rel (%p61) target = $region21
    $region20: #{tpu_custom_call.1} parent=1 // pred_region
      %64 = vst [vmem:[#allocation7] sm:$0xff] 0.0
    $region21: #{tpu_custom_call.1} parent=1 // pred_fallthru
      _
    %v65 = vld [vmem:[#allocation2] sm:$0xff]
    %v66 = vld [vmem:[#allocation2 + $0x8] sm:$0xff]
    %v67 = vld [vmem:[#allocation5] sm:$0xff]
    %v68 = vld [vmem:[#allocation5 + $0x8] sm:$0xff]
    %v69 = vsub.f32 %v65, %v67
    %v70 = vsub.f32 %v66, %v68
    %v71 = vand.u32 2147483647, %v69
    %v72 = vand.u32 2147483647, %v70
    %v73 = vadd.f32 %v67, 1.5259022e-05
    %v74 = vadd.f32 %v68, 1.5259022e-05
    %v75 = vrcp.pop %v73
    %v76 = vmul.f32 %v71, %v75
    %v77 = vrcp.pop %v74
    %v78 = vmul.f32 %v72, %v77
    %v79 = vld [vmem:[#allocation7] sm:$0xff]
    %v80 = vadd.f32 %v76, %v78
    %v81 = vadd.f32 %v79, %v80
    %82 = vst [vmem:[#allocation7] sm:$0xff] %v81
    // Predicated region
    $region22: #{tpu_custom_call.1} parent=1 // pred_check
      _
    $region23: #{tpu_custom_call.1} parent=1 // pred_check_branch
      %84 = sbr.rel (0) target = $region25
    $region24: #{tpu_custom_call.1} parent=1 // pred_region
      %s86 = ssub.s32 128, 128
      %87 = vsyncadd [#allocation4], %s86
      %s89 = sshll.u32 [#allocation7], 4
      %s90 = int_to_ptr.vmem [resolvable:$true] %s89
      %92 = dma.vmem_to_hbm [thread:$0]  %s90, 128, %s2, [#allocation4]
    $region25: #{tpu_custom_call.1} parent=1 // pred_fallthru
      _
    // Predicated region
    $region26: #{tpu_custom_call.1} parent=1 // pred_check
      _
    $region27: #{tpu_custom_call.1} parent=1 // pred_check_branch
      %94 = sbr.rel (0) target = $region29
    $region28: #{tpu_custom_call.1} parent=1 // pred_region
      %95 = dma.done [#allocation4], 128
    $region29: #{tpu_custom_call.1} parent=1 // pred_fallthru
      _
    %96 = vsyncpa [#allocation3], 1
    %97 = vsyncpa [#allocation6], 1
    %98 = vsyncpa [#allocation4], 1

</llo_original>
